<compile_context>
chip_gen: v5e
topology: v5e:2x2
jax: 0.10.0
libtpu: 0.0.40
codegen_flags: <defaults>
</compile_context>

<pallas_src>
import jax
import jax.numpy as jnp
from jax.experimental import pallas as pl
from jax.experimental.pallas import tpu as pltpu


# ---------------------------------------------------------------------------
# Fused kernel: gamma/beta projection + broadcast FMA, per grid step.
# ---------------------------------------------------------------------------
def _film_kernel(cond_ref, w_ref, b_ref, x_ref, o_ref):
    # cond_ref: (1, 1, D)          condition row for this batch
    # w_ref:    (2, C_TILE, D)     [gamma; beta] rows of the projection weight
    # b_ref:    (2, C_TILE, 1)     [gamma; beta] bias
    # x_ref/o_ref: (1, C_TILE, HW_TILE)
    cond = cond_ref[0].astype(jnp.float32)                 # (1, D)
    wg = w_ref[0].astype(jnp.float32)                      # (C_TILE, D)
    wb = w_ref[1].astype(jnp.float32)                      # (C_TILE, D)
    # Projection as broadcast-multiply + lane reduction (VPU/XLU slots have
    # huge slack in this HBM-bound kernel, so this is effectively free).
    gamma = jnp.sum(wg * cond, axis=-1, keepdims=True) + b_ref[0].astype(jnp.float32)
    beta = jnp.sum(wb * cond, axis=-1, keepdims=True) + b_ref[1].astype(jnp.float32)
    # Per-channel broadcast FMA over the lane-dense HW axis; cast once on store.
    o_ref[0] = (gamma * x_ref[0] + beta).astype(o_ref.dtype)


# ---------------------------------------------------------------------------
# Generation-aware VMEM budget and tile selection.
# ---------------------------------------------------------------------------
def _vmem_budget_bytes():
    """~75% of physical VMEM (96 MiB on v5e/v6e, 48 MiB on v7x), conservative
    fallback if the query is unavailable."""
    phys = 0
    try:
        phys = int(getattr(pltpu.get_tpu_info(), "vmem_capacity_bytes", 0))
    except Exception:
        phys = 0
    if phys <= 0:
        phys = 64 * 1024 * 1024  # assume the smallest generation (v7x) if unknown
    return min((phys * 3) // 4, 96 * 1024 * 1024)


def _pick_tile(dim, unit, cap):
    """Full extent if the dim fits under the cap (always a legal block),
    otherwise the largest multiple of `unit` that fits under the cap."""
    if dim <= cap:
        return dim
    return max(unit, (cap // unit) * unit)


# ---------------------------------------------------------------------------
# Public forward.
# ---------------------------------------------------------------------------
def film_forward(x, condition, weight, bias, *, c_tile_max=512):
    """FiLM forward pass.

    x: (B, C, H, W) NCHW; condition: (B, D);
    weight: (2C, D) (PyTorch nn.Linear layout); bias: (2C,).
    """
    B, C, H, W = x.shape
    Bc, D = condition.shape
    assert Bc == B and weight.shape == (2 * C, D) and bias.shape == (2 * C,)
    HW = H * W

    # Free metadata reshapes only — no transpose / dtype cast round-trip in HBM.
    x3 = x.reshape(B, C, HW)
    cond3 = condition.reshape(B, 1, D)
    w3 = weight.reshape(2, C, D)       # [gamma rows; beta rows]
    b3 = bias.reshape(2, C, 1)

    itemsize = jnp.dtype(x.dtype).itemsize
    # Dtype-aware sublane packing unit: 8 for f32, 16 for bf16, 32 for int8/fp8.
    sub_unit = max(8, 32 // itemsize)

    budget = _vmem_budget_bytes()
    # 2 x-buffers + 2 out-buffers <= 2/3 of the budget; the rest is headroom
    # for the (tiny) weight/cond/bias buffers and compiler-internal scratch.
    block_bytes = budget // 6
    block_elems = max(block_bytes // itemsize, 128 * sub_unit)

    c_tile = _pick_tile(C, sub_unit, c_tile_max)        # sublane-aligned channel tile
    hw_cap = max(128, block_elems // c_tile)
    hw_tile = _pick_tile(HW, 128, hw_cap)               # lane-dense spatial tile
    grid = (B, pl.cdiv(C, c_tile), pl.cdiv(HW, hw_tile))

    out3 = pl.pallas_call(
        _film_kernel,
        out_shape=jax.ShapeDtypeStruct((B, C, HW), x.dtype),
        grid=grid,
        in_specs=[
            pl.BlockSpec((1, 1, D), lambda b, c, h: (b, 0, 0)),            # condition
            pl.BlockSpec((2, c_tile, D), lambda b, c, h: (0, c, 0)),       # weight
            pl.BlockSpec((2, c_tile, 1), lambda b, c, h: (0, c, 0)),       # bias
            pl.BlockSpec((1, c_tile, hw_tile), lambda b, c, h: (b, c, h)),  # x
        ],
        out_specs=pl.BlockSpec((1, c_tile, hw_tile), lambda b, c, h: (b, c, h)),
        compiler_params=pltpu.CompilerParams(
            # No accumulator / cross-step state -> every axis is safely
            # "parallel"; on v7x this lets both TensorCores share the HW axis.
            dimension_semantics=("parallel", "parallel", "parallel"),
            vmem_limit_bytes=budget,
        ),
    )(cond3, w3, b3, x3)

    return out3.reshape(B, C, H, W)


# ---------------------------------------------------------------------------
# Pure-JAX reference for correctness checking.
# ---------------------------------------------------------------------------
def film_reference(x, condition, weight, bias):
    gamma_beta = condition @ weight.T + bias            # (B, 2C)
    C = x.shape[1]
    gamma = gamma_beta[:, :C][:, :, None, None]
    beta = gamma_beta[:, C:][:, :, None, None]
    return gamma * x + beta


if __name__ == "__main__":
    B, C, H, W = 2, 4, 16, 16
    D = 8  # condition_dim

    key = jax.random.PRNGKey(0)
    kx, kc, kw, kb = jax.random.split(key, 4)

    x = jax.random.normal(kx, (B, C, H, W), dtype=jnp.float32)
    condition = jax.random.normal(kc, (B, D), dtype=jnp.float32)

    # Deterministic nn.Linear-style init: U(-1/sqrt(D), 1/sqrt(D)).
    bound = 1.0 / (D ** 0.5)
    weight = jax.random.uniform(kw, (2 * C, D), minval=-bound, maxval=bound,
                                dtype=jnp.float32)
    bias = jax.random.uniform(kb, (2 * C,), minval=-bound, maxval=bound,
                              dtype=jnp.float32)

    out = jax.block_until_ready(film_forward(x, condition, weight, bias))
    ref = film_reference(x, condition, weight, bias)

    assert out.shape == (B, C, H, W)
    assert jnp.allclose(out, ref, atol=1e-5, rtol=1e-5)

    print("KERNEL_OK")
</pallas_src>

<mosaic_0001>
module attributes {stable_mosaic.version = 11 : i64} {
  func.func @_film_kernel(%arg0: i32, %arg1: i32, %arg2: i32, %arg3: memref<1x1x8xf32, #tpu.memory_space<vmem>>, %arg4: memref<2x4x8xf32, #tpu.memory_space<vmem>>, %arg5: memref<2x4x1xf32, #tpu.memory_space<vmem>>, %arg6: memref<1x4x256xf32, #tpu.memory_space<vmem>>, %arg7: memref<1x4x256xf32, #tpu.memory_space<vmem>>) attributes {dimension_semantics = [#tpu.dimension_semantics<parallel>, #tpu.dimension_semantics<parallel>, #tpu.dimension_semantics<parallel>], iteration_bounds = array<i64: 2, 1, 1>, scalar_prefetch = 0 : i64, scratch_operands = 0 : i64, tpu.core_type = #tpu.core_type<tc>, window_params = [{transform_indices = @transform_0, window_bounds = array<i64: 1, 1, 8>}, {transform_indices = @transform_1, window_bounds = array<i64: 2, 4, 8>}, {transform_indices = @transform_2, window_bounds = array<i64: 2, 4, 1>}, {transform_indices = @transform_3, window_bounds = array<i64: 1, 4, 256>}, {transform_indices = @transform_4, window_bounds = array<i64: 1, 4, 256>}]} {
    %c0 = arith.constant 0 : index
    %c0_0 = arith.constant 0 : index
    %c0_1 = arith.constant 0 : index
    %0 = vector.load %arg3[%c0, %c0_0, %c0_1] : memref<1x1x8xf32, #tpu.memory_space<vmem>>, vector<1x1x8xf32>
    %1 = vector.shape_cast %0 : vector<1x1x8xf32> to vector<1x8xf32>
    %c0_2 = arith.constant 0 : index
    %c0_3 = arith.constant 0 : index
    %c0_4 = arith.constant 0 : index
    %2 = vector.load %arg4[%c0_2, %c0_3, %c0_4] : memref<2x4x8xf32, #tpu.memory_space<vmem>>, vector<1x4x8xf32>
    %3 = vector.shape_cast %2 : vector<1x4x8xf32> to vector<4x8xf32>
    %c1 = arith.constant 1 : index
    %c0_5 = arith.constant 0 : index
    %c0_6 = arith.constant 0 : index
    %4 = vector.load %arg4[%c1, %c0_5, %c0_6] : memref<2x4x8xf32, #tpu.memory_space<vmem>>, vector<1x4x8xf32>
    %5 = vector.shape_cast %4 : vector<1x4x8xf32> to vector<4x8xf32>
    %6 = vector.broadcast %1 : vector<1x8xf32> to vector<4x8xf32>
    %7 = arith.mulf %3, %6 : vector<4x8xf32>
    %cst = arith.constant dense<0.000000e+00> : vector<4xf32>
    %8 = vector.multi_reduction <add>, %7, %cst [1] : vector<4x8xf32> to vector<4xf32>
    %9 = vector.shape_cast %8 : vector<4xf32> to vector<4x1xf32>
    %c0_7 = arith.constant 0 : index
    %c0_8 = arith.constant 0 : index
    %c0_9 = arith.constant 0 : index
    %10 = vector.load %arg5[%c0_7, %c0_8, %c0_9] : memref<2x4x1xf32, #tpu.memory_space<vmem>>, vector<1x4x1xf32>
    %11 = vector.shape_cast %10 : vector<1x4x1xf32> to vector<4x1xf32>
    %12 = arith.addf %9, %11 : vector<4x1xf32>
    %13 = vector.broadcast %1 : vector<1x8xf32> to vector<4x8xf32>
    %14 = arith.mulf %5, %13 : vector<4x8xf32>
    %cst_10 = arith.constant dense<0.000000e+00> : vector<4xf32>
    %15 = vector.multi_reduction <add>, %14, %cst_10 [1] : vector<4x8xf32> to vector<4xf32>
    %16 = vector.shape_cast %15 : vector<4xf32> to vector<4x1xf32>
    %c1_11 = arith.constant 1 : index
    %c0_12 = arith.constant 0 : index
    %c0_13 = arith.constant 0 : index
    %17 = vector.load %arg5[%c1_11, %c0_12, %c0_13] : memref<2x4x1xf32, #tpu.memory_space<vmem>>, vector<1x4x1xf32>
    %18 = vector.shape_cast %17 : vector<1x4x1xf32> to vector<4x1xf32>
    %19 = arith.addf %16, %18 : vector<4x1xf32>
    %c0_14 = arith.constant 0 : index
    %c0_15 = arith.constant 0 : index
    %c0_16 = arith.constant 0 : index
    %20 = vector.load %arg6[%c0_14, %c0_15, %c0_16] : memref<1x4x256xf32, #tpu.memory_space<vmem>>, vector<1x4x256xf32>
    %21 = vector.shape_cast %20 : vector<1x4x256xf32> to vector<4x256xf32>
    %22 = vector.broadcast %12 : vector<4x1xf32> to vector<4x256xf32>
    %23 = arith.mulf %22, %21 : vector<4x256xf32>
    %24 = vector.broadcast %19 : vector<4x1xf32> to vector<4x256xf32>
    %25 = arith.addf %23, %24 : vector<4x256xf32>
    %c0_17 = arith.constant 0 : index
    %c0_18 = arith.constant 0 : index
    %c0_19 = arith.constant 0 : index
    %26 = vector.load %arg7[%c0_17, %c0_18, %c0_19] : memref<1x4x256xf32, #tpu.memory_space<vmem>>, vector<1x4x256xf32>
    %27 = vector.shape_cast %26 : vector<1x4x256xf32> to vector<4x256xf32>
    %28 = vector.shape_cast %25 : vector<4x256xf32> to vector<1x4x256xf32>
    tpu.vector_store %arg7[%c0_17, %c0_18, %c0_19], %28 {strides = array<i32>} : memref<1x4x256xf32, #tpu.memory_space<vmem>>, vector<1x4x256xf32>,
    return
  }
  func.func @transform_0(%arg0: i32, %arg1: i32, %arg2: i32) -> (i32, i32, i32) {
    %c0_i32 = arith.constant 0 : i32
    %c0_i32_0 = arith.constant 0 : i32
    %c0_i32_1 = arith.constant 0 : i32
    return %arg0, %c0_i32, %c0_i32_0 : i32, i32, i32
  }
  func.func @transform_1(%arg0: i32, %arg1: i32, %arg2: i32) -> (i32, i32, i32) {
    %c0_i32 = arith.constant 0 : i32
    %c0_i32_0 = arith.constant 0 : i32
    %c0_i32_1 = arith.constant 0 : i32
    return %c0_i32, %arg1, %c0_i32_0 : i32, i32, i32
  }
  func.func @transform_2(%arg0: i32, %arg1: i32, %arg2: i32) -> (i32, i32, i32) {
    %c0_i32 = arith.constant 0 : i32
    %c0_i32_0 = arith.constant 0 : i32
    %c0_i32_1 = arith.constant 0 : i32
    return %c0_i32, %arg1, %c0_i32_0 : i32, i32, i32
  }
  func.func @transform_3(%arg0: i32, %arg1: i32, %arg2: i32) -> (i32, i32, i32) {
    %c0_i32 = arith.constant 0 : i32
    return %arg0, %arg1, %arg2 : i32, i32, i32
  }
  func.func @transform_4(%arg0: i32, %arg1: i32, %arg2: i32) -> (i32, i32, i32) {
    %c0_i32 = arith.constant 0 : i32
    return %arg0, %arg1, %arg2 : i32, i32, i32
  }
}

</mosaic_0001>

<llo_original>
// kernel: tpu_custom_call.1
$region0: #{tpu_custom_call.1}
  #allocation0 [shape = 'u32[]', space=smem, size = 0x4, offset = 0x4, fixed_abs, tag = 'smem constant byte address 0x4 - core index']
  #allocation1 [shape = 'u32[72,128]{1,0:T(1,128)}', space=vmem, size = 0x9000, scoped, tag = 'internal scratch']
  %s0 = inlined_call_operand.vmem [shape: f32[2,1,8], index: 0, kind: input, shape index: {}]
  %s1 = inlined_call_operand.vmem [shape: f32[2,4,8], index: 1, kind: input, shape index: {}]
  %s2 = inlined_call_operand.vmem [shape: f32[2,4,1], index: 2, kind: input, shape index: {}]
  %s3 = inlined_call_operand.hbm [shape: f32[2,4,256], index: 3, kind: input, shape index: {}]
  %s4 = inlined_call_operand.hbm [shape: f32[2,4,256], index: 4, kind: output, shape index: {}]
  %s5 = sld [smem:[#allocation0]]
  $region53: #{tpu_custom_call.1} parent=0
    _
  %s7 = ssub.s32 1, %s5
  %s8 = scalar_select 0, %s7, %s5
  $region1: #{tpu_custom_call.1} parent=0
    #allocation2 [shape = 'u8[8192]{0}', space=vmem, size = 0x2000, scoped, tag = 'input window, operand 3']
    #allocation3 [shape = 's32[2]{0}', space=sflag, size = 0x8, scoped, tag = 'scoped memory for tpu_custom_call.1']
    #allocation4 [shape = 's32[2]{0}', space=sflag, size = 0x8, scoped, tag = 'scoped memory for tpu_custom_call.1']
    #allocation5 [shape = 'u8[8192]{0}', space=vmem, size = 0x2000, scoped, tag = 'output window, operand 0']
    %9 = vsyncpa [#allocation3], 0
    %s10 = scalar_lea.sflag [#allocation3], 1
    %11 = vsyncpa %s10, 0
    %12 = vsyncpa [#allocation4], 0
    %s13 = scalar_lea.sflag [#allocation4], 1
    %14 = vsyncpa %s13, 0
    loop: start=0, step=1, limit=4
    $region2: #{tpu_custom_call.1} parent=1 // loop_pre_header
      _
    $region3: #{tpu_custom_call.1} parent=1 // loop_header
      %s16 = sphi 0, %s20
      %p17 = scmp.ge.s32.totalorder %s16, 4
      %s23 = sphi 0, %s42
      %s24 = sphi 0, %s38
      %s25 = sphi 0, %s34
      %s26 = sphi 0, %s23
      %s27 = sphi 0, %s24
      %s28 = sphi 0, %s25
      %s29 = sphi 0, %s26
      %s30 = sphi 0, %s27
      %s31 = sphi 0, %s28
      %s45 = sphi 0, %s47
      %s48 = sphi 0, %s45
      %s49 = sphi 0, %s48
      %s65 = sphi 0, %s49
      %s71 = sphi 0, %s73
      %s74 = sphi 0, %s71
      %s75 = sphi 0, %s74
      %s91 = sphi 0, %s75
      %s97 = sphi 0, %s99
      %s100 = sphi 0, %s97
      %s101 = sphi 0, %s100
      %s117 = sphi 0, %s101
      %s127 = sphi 0, %s129
      %s130 = sphi 0, %s127
      %s131 = sphi 0, %s130
      %s147 = sphi 0, %s131
      %s157 = sphi 0, %s159
      %s160 = sphi 0, %s157
      %s161 = sphi 0, %s160
      %s177 = sphi 0, %s161
    $region4: #{tpu_custom_call.1} parent=1 // loop_header_branch
      %19 = sbr.rel (%p17) target = $region8
    $region5: #{tpu_custom_call.1} parent=1 // loop_body
      %s21 = ssub.s32 %s16, 1
      %s22 = ssub.s32 %s16, 2
      %s32 = sadd.s32 1, %s25
      %p33 = scmp.ge.s32.totalorder %s32, 1
      %s34 = scalar_select %p33, 0, %s32
      %s35 = sadd.s32 1, %s24
      %s36 = scalar_select %p33, %s35, %s24
      %p37 = scmp.ge.s32.totalorder %s36, 1
      %s38 = scalar_select %p37, 0, %s36
      %s39 = sadd.s32 1, %s23
      %s40 = scalar_select %p37, %s39, %s23
      %p41 = scmp.ge.s32.totalorder %s40, 2
      %s42 = scalar_select %p41, 0, %s40
      %s43 = ssub.s32 %s23, %s42
      %p44 = scmp.eq.s32.totalorder %s43, 0
      %s46 = sadd.s32 %s45, 1
      %s47 = scalar_select %p44, %s45, %s46
      %p50 = pneg %p44
      %p51 = scmp.eq.s32.totalorder %s16, 1
      %p52 = por %p50, %p51
      %p53 = scmp.ne.s32.totalorder %s45, %s48
      %p54 = scmp.eq.s32.totalorder %s16, 0
      %p55 = por %p53, %p54
      %p56 = scmp.ne.s32.totalorder %s45, %s48
      %p57 = scmp.eq.s32.totalorder %s21, 1
      %p58 = por %p56, %p57
      %p59 = scmp.ne.s32.totalorder %s48, %s49
      %p60 = scmp.eq.s32.totalorder %s21, 0
      %p61 = por %p59, %p60
      %p62 = scmp.ne.s32.totalorder %s48, %s49
      %p63 = scmp.eq.s32.totalorder %s22, 1
      %p64 = por %p62, %p63
      %p66 = scmp.ne.s32.totalorder %s49, %s65
      %p67 = scmp.eq.s32.totalorder %s22, 0
      %p68 = por %p66, %p67
      %s69 = ssub.s32 %s24, %s38
      %p70 = scmp.eq.s32.totalorder %s69, 0
      %s72 = sadd.s32 %s71, 1
      %s73 = scalar_select %p70, %s71, %s72
      %p76 = pneg %p70
      %p77 = scmp.eq.s32.totalorder %s16, 1
      %p78 = por %p76, %p77
      %p79 = scmp.ne.s32.totalorder %s71, %s74
      %p80 = scmp.eq.s32.totalorder %s16, 0
      %p81 = por %p79, %p80
      %p82 = scmp.ne.s32.totalorder %s71, %s74
      %p83 = scmp.eq.s32.totalorder %s21, 1
      %p84 = por %p82, %p83
      %p85 = scmp.ne.s32.totalorder %s74, %s75
      %p86 = scmp.eq.s32.totalorder %s21, 0
      %p87 = por %p85, %p86
      %p88 = scmp.ne.s32.totalorder %s74, %s75
      %p89 = scmp.eq.s32.totalorder %s22, 1
      %p90 = por %p88, %p89
      %p92 = scmp.ne.s32.totalorder %s75, %s91
      %p93 = scmp.eq.s32.totalorder %s22, 0
      %p94 = por %p92, %p93
      %s95 = ssub.s32 %s24, %s38
      %p96 = scmp.eq.s32.totalorder %s95, 0
      %s98 = sadd.s32 %s97, 1
      %s99 = scalar_select %p96, %s97, %s98
      %p102 = pneg %p96
      %p103 = scmp.eq.s32.totalorder %s16, 1
      %p104 = por %p102, %p103
      %p105 = scmp.ne.s32.totalorder %s97, %s100
      %p106 = scmp.eq.s32.totalorder %s16, 0
      %p107 = por %p105, %p106
      %p108 = scmp.ne.s32.totalorder %s97, %s100
      %p109 = scmp.eq.s32.totalorder %s21, 1
      %p110 = por %p108, %p109
      %p111 = scmp.ne.s32.totalorder %s100, %s101
      %p112 = scmp.eq.s32.totalorder %s21, 0
      %p113 = por %p111, %p112
      %p114 = scmp.ne.s32.totalorder %s100, %s101
      %p115 = scmp.eq.s32.totalorder %s22, 1
      %p116 = por %p114, %p115
      %p118 = scmp.ne.s32.totalorder %s101, %s117
      %p119 = scmp.eq.s32.totalorder %s22, 0
      %p120 = por %p118, %p119
      %s121 = ssub.s32 %s23, %s42
      %s122 = ssub.s32 %s24, %s38
      %s123 = sor.u32 %s121, %s122
      %s124 = ssub.s32 %s25, %s34
      %s125 = sor.u32 %s123, %s124
      %p126 = scmp.eq.s32.totalorder %s125, 0
      %s128 = sadd.s32 %s127, 1
      %s129 = scalar_select %p126, %s127, %s128
      %p132 = pneg %p126
      %p133 = scmp.eq.s32.totalorder %s16, 1
      %p134 = por %p132, %p133
      %p135 = scmp.ne.s32.totalorder %s127, %s130
      %p136 = scmp.eq.s32.totalorder %s16, 0
      %p137 = por %p135, %p136
      %p138 = scmp.ne.s32.totalorder %s127, %s130
      %p139 = scmp.eq.s32.totalorder %s21, 1
      %p140 = por %p138, %p139
      %p141 = scmp.ne.s32.totalorder %s130, %s131
      %p142 = scmp.eq.s32.totalorder %s21, 0
      %p143 = por %p141, %p142
      %p144 = scmp.ne.s32.totalorder %s130, %s131
      %p145 = scmp.eq.s32.totalorder %s22, 1
      %p146 = por %p144, %p145
      %p148 = scmp.ne.s32.totalorder %s131, %s147
      %p149 = scmp.eq.s32.totalorder %s22, 0
      %p150 = por %p148, %p149
      %s151 = ssub.s32 %s23, %s42
      %s152 = ssub.s32 %s24, %s38
      %s153 = sor.u32 %s151, %s152
      %s154 = ssub.s32 %s25, %s34
      %s155 = sor.u32 %s153, %s154
      %p156 = scmp.eq.s32.totalorder %s155, 0
      %s158 = sadd.s32 %s157, 1
      %s159 = scalar_select %p156, %s157, %s158
      %p162 = pneg %p156
      %p163 = scmp.eq.s32.totalorder %s16, 1
      %p164 = por %p162, %p163
      %p165 = scmp.ne.s32.totalorder %s157, %s160
      %p166 = scmp.eq.s32.totalorder %s16, 0
      %p167 = por %p165, %p166
      %p168 = scmp.ne.s32.totalorder %s157, %s160
      %p169 = scmp.eq.s32.totalorder %s21, 1
      %p170 = por %p168, %p169
      %p171 = scmp.ne.s32.totalorder %s160, %s161
      %p172 = scmp.eq.s32.totalorder %s21, 0
      %p173 = por %p171, %p172
      %p174 = scmp.ne.s32.totalorder %s160, %s161
      %p175 = scmp.eq.s32.totalorder %s22, 1
      %p176 = por %p174, %p175
      %p178 = scmp.ne.s32.totalorder %s161, %s177
      %p179 = scmp.eq.s32.totalorder %s22, 0
      %p180 = por %p178, %p179
      %p181 = scmp.le.s32.totalorder 1, %s16
      %p182 = scmp.lt.s32.totalorder %s16, 3
      %p183 = pnand %p181, %p182
      %p184 = pneg %p183
      // Predicated region
      $region9: #{tpu_custom_call.1} parent=5 // pred_check
        _
      $region10: #{tpu_custom_call.1} parent=5 // pred_check_branch
        %186 = sbr.rel (%p183) target = $region12
      $region11: #{tpu_custom_call.1} parent=5 // pred_region
        %s187 = ssub.s32 %s16, 1
        // Predicated region
        $region13: #{tpu_custom_call.1} parent=11 // pred_check
          %p188 = pneg %p87
        $region14: #{tpu_custom_call.1} parent=11 // pred_check_branch
          %190 = sbr.rel (%p188) target = $region16
        $region15: #{tpu_custom_call.1} parent=11 // pred_region
          %p191 = scmp.lt.s32.totalorder %s27, 0
          %s192 = scalar_select %p191, %s27, 0
          %s193 = smul.addr %s192, 4
          %s194 = scalar_lea.vmem %s1, %s193
        $region16: #{tpu_custom_call.1} parent=11 // pred_fallthru
          _
        // Predicated region
        $region17: #{tpu_custom_call.1} parent=11 // pred_check
          %p195 = pneg %p113
        $region18: #{tpu_custom_call.1} parent=11 // pred_check_branch
          %197 = sbr.rel (%p195) target = $region20
        $region19: #{tpu_custom_call.1} parent=11 // pred_region
          %p198 = scmp.lt.s32.totalorder %s27, 0
          %s199 = scalar_select %p198, %s27, 0
          %s200 = smul.addr %s199, 4
          %s201 = scalar_lea.vmem %s2, %s200
        $region20: #{tpu_custom_call.1} parent=11 // pred_fallthru
          _
      $region12: #{tpu_custom_call.1} parent=5 // pred_fallthru
        _
      %p202 = scmp.lt.s32.totalorder %s16, 2
      // Predicated region
      $region21: #{tpu_custom_call.1} parent=5 // pred_check
        %p203 = pneg %p202
      $region22: #{tpu_custom_call.1} parent=5 // pred_check_branch
        %205 = sbr.rel (%p203) target = $region24
      $region23: #{tpu_custom_call.1} parent=5 // pred_region
        // Predicated region
        $region25: #{tpu_custom_call.1} parent=23 // pred_check
          %p206 = pneg %p55
        $region26: #{tpu_custom_call.1} parent=23 // pred_check_branch
          %208 = sbr.rel (%p206) target = $region28
        $region27: #{tpu_custom_call.1} parent=23 // pred_region
          %p209 = scmp.lt.s32.totalorder %s23, 1
          %s210 = scalar_select %p209, %s23, 1
          %s211 = scalar_lea.vmem %s0, %s210
        $region28: #{tpu_custom_call.1} parent=23 // pred_fallthru
          _
        // Predicated region
        $region29: #{tpu_custom_call.1} parent=23 // pred_check
          %p212 = pneg %p137
        $region30: #{tpu_custom_call.1} parent=23 // pred_check_branch
          %214 = sbr.rel (%p212) target = $region32
        $region31: #{tpu_custom_call.1} parent=23 // pred_region
          %s215 = sand.u32 %s127, 1
          %s216 = scalar_lea.sflag [#allocation3], %s215
          %s217 = sand.u32 %s127, 1
          %s218 = smul.addr %s217, 8
          %s219 = scalar_lea.vmem [#allocation2], %s218
          %s220 = smul.u32 2, %s25
          %222 = vsyncadd %s216, 0
          %s223 = smul.addr %s24, 2
          %s224 = sadd.s32 %s220, %s223
          %s225 = smul.addr %s23, 2
          %s226 = sadd.s32 %s224, %s225
          %s227 = smul.addr %s226, 4
          %s228 = scalar_lea.hbm %s3, %s227
          %s230 = sshll.u32 %s228, 4
          %s231 = int_to_ptr.hbm [resolvable:$true] %s230
          %s232 = sshll.u32 %s219, 4
          %s233 = int_to_ptr.vmem [resolvable:$true] %s232
          %235 = dma.hbm_to_vmem [thread:$0]  %s231, 128, %s233, %s216
        $region32: #{tpu_custom_call.1} parent=23 // pred_fallthru
          _
      $region24: #{tpu_custom_call.1} parent=5 // pred_fallthru
        _
      %p236 = scmp.le.s32.totalorder 1, %s16
      %p237 = scmp.lt.s32.totalorder %s16, 3
      %p238 = pnand %p236, %p237
      %p239 = pneg %p238
      // Predicated region
      $region33: #{tpu_custom_call.1} parent=5 // pred_check
        _
      $region34: #{tpu_custom_call.1} parent=5 // pred_check_branch
        %241 = sbr.rel (%p238) target = $region36
      $region35: #{tpu_custom_call.1} parent=5 // pred_region
        %s242 = ssub.s32 %s16, 1
        %s243 = sand.u32 %s130, 1
        %s244 = scalar_lea.sflag [#allocation3], %s243
        %s245 = sand.u32 %s130, 1
        %s246 = smul.addr %s245, 8
        %s247 = scalar_lea.vmem [#allocation2], %s246
        // Predicated region
        $region37: #{tpu_custom_call.1} parent=35 // pred_check
          %p248 = pneg %p143
        $region38: #{tpu_custom_call.1} parent=35 // pred_check_branch
          %250 = sbr.rel (%p248) target = $region40
        $region39: #{tpu_custom_call.1} parent=35 // pred_region
          %252 = dma.done %s244, 128
        $region40: #{tpu_custom_call.1} parent=35 // pred_fallthru
          _
        %p253 = scmp.lt.s32.totalorder %s26, 1
        %s254 = scalar_select %p253, %s26, 1
        %s255 = scalar_lea.vmem %s0, %s254
        %p256 = pneg %p61
        %p257 = pneg %p58
        %p258 = scmp.lt.s32.totalorder %s27, 0
        %s259 = scalar_select %p258, %s27, 0
        %s260 = smul.addr %s259, 4
        %s261 = scalar_lea.vmem %s1, %s260
        %p262 = pneg %p87
        %p263 = pneg %p84
        %p264 = scmp.lt.s32.totalorder %s27, 0
        %s265 = scalar_select %p264, %s27, 0
        %s266 = smul.addr %s265, 4
        %s267 = scalar_lea.vmem %s2, %s266
        %p268 = pneg %p113
        %p269 = pneg %p110
        %s270 = sand.u32 %s130, 1
        %s271 = scalar_lea.sflag [#allocation3], %s270
        %s272 = sand.u32 %s130, 1
        %s273 = smul.addr %s272, 8
        %s274 = scalar_lea.vmem [#allocation2], %s273
        %p275 = pneg %p143
        %p276 = pneg %p140
        %p277 = pneg %p173
        %p278 = pneg %p170
        %s279 = sand.u32 %s160, 1
        %s280 = scalar_lea.sflag [#allocation4], %s279
        %s281 = sand.u32 %s160, 1
        %s282 = smul.addr %s281, 8
        %s283 = scalar_lea.vmem [#allocation5], %s282
        %p284 = scmp.lt.s32.totalorder %s26, 1
        %s285 = scalar_select %p284, %s26, 1
        %s286 = scalar_lea.vmem %s0, %s285
        %p287 = scmp.lt.s32.totalorder %s27, 0
        %s288 = scalar_select %p287, %s27, 0
        %s289 = smul.addr %s288, 4
        %s290 = scalar_lea.vmem %s1, %s289
        %p291 = scmp.lt.s32.totalorder %s27, 0
        %s292 = scalar_select %p291, %s27, 0
        %s293 = smul.addr %s292, 4
        %s294 = scalar_lea.vmem %s2, %s293
        %s295 = smul.u32 2, %s28
        %s296 = smul.u32 2, %s28
        %v297 = vld [vmem:[%s286] sm:$0x1]
        %v298 = vld [vmem:[%s290] sm:$0xf]
        %s299 = scalar_lea.vmem %s290, 4
        %v300 = vld [vmem:[%s299] sm:$0xf]
        %v302 = vperm.slane %v297, 0
        %v304 = vmul.f32 %v298, %v302
        %vm305 = vcmask 60416
        %v306 = vsel %vm305, %v304, 0.0
        %307 = vadd.xlane.f32.xlu0 %v306
        %v308 = vpop.xlane.xlu0 %307
        %v309 = vld [vmem:[%s294] sm:$0xf]
        %v310 = vadd.f32 %v308, %v309
        %v311 = vmul.f32 %v300, %v302
        %v312 = vsel %vm305, %v311, 0.0
        %313 = vadd.xlane.f32.xlu0 %v312
        %v314 = vpop.xlane.xlu0 %313
        %s315 = scalar_lea.vmem %s294, 4
        %v316 = vld [vmem:[%s315] sm:$0xf]
        %v317 = vadd.f32 %v314, %v316
        %v318 = vld [vmem:[%s247] sm:$0xff]
        %320 = vset.pattern.permute.xlu0 0
        %321 = vperm.xlu0 %320, %v310
        %v322 = vpop.permute.xlu0 %321
        %325 = vst [vmem:[#allocation1] ss:$2 sm:$0xff] %v318
        %v326 = vld.sshfl [vmem:[#allocation1] sm:$0xff pattern:$0x75316420]
        %v327 = vld.sshfl [vmem:[#allocation1 + $0x8] sm:$0xff pattern:$0x75316420]
        %v330 = vmul.f32 %v322, %v326
        %v331 = vmul.f32 %v322, %v327
        %333 = vset.pattern.permute.xlu0 0
        %334 = vperm.xlu0 %333, %v317
        %v335 = vpop.permute.xlu0 %334
        %v337 = vadd.f32 %v330, %v335
        %v338 = vadd.f32 %v331, %v335
        %v341 = vrot.slane %v338, 4
        %vm342 = vcmask 1043456
        %v343 = vsel %vm342, %v337, %v341
        %345 = vst [vmem:[%s283] sm:$0xff] %v343
        %s346 = sand.u32 %s160, 1
        %s347 = scalar_lea.sflag [#allocation4], %s346
        %s348 = sand.u32 %s160, 1
        %s349 = smul.addr %s348, 8
        %s350 = scalar_lea.vmem [#allocation5], %s349
        // Predicated region
        $region41: #{tpu_custom_call.1} parent=35 // pred_check
          %p351 = pneg %p170
        $region42: #{tpu_custom_call.1} parent=35 // pred_check_branch
          %353 = sbr.rel (%p351) target = $region44
        $region43: #{tpu_custom_call.1} parent=35 // pred_region
          %s354 = smul.u32 2, %s28
          %356 = vsyncadd %s347, 0
          %s357 = smul.addr %s27, 2
          %s358 = sadd.s32 %s354, %s357
          %s359 = smul.addr %s26, 2
          %s360 = sadd.s32 %s358, %s359
          %s361 = smul.addr %s360, 4
          %s362 = scalar_lea.hbm %s4, %s361
          %s364 = sshll.u32 %s350, 4
          %s365 = int_to_ptr.vmem [resolvable:$true] %s364
          %s366 = sshll.u32 %s362, 4
          %s367 = int_to_ptr.hbm [resolvable:$true] %s366
          %369 = dma.vmem_to_hbm [thread:$0]  %s365, 128, %s367, %s347
        $region44: #{tpu_custom_call.1} parent=35 // pred_fallthru
          _
      $region36: #{tpu_custom_call.1} parent=5 // pred_fallthru
        _
      %p370 = scmp.le.s32.totalorder 2, %s16
      // Predicated region
      $region45: #{tpu_custom_call.1} parent=5 // pred_check
        %p371 = pneg %p370
      $region46: #{tpu_custom_call.1} parent=5 // pred_check_branch
        %373 = sbr.rel (%p371) target = $region48
      $region47: #{tpu_custom_call.1} parent=5 // pred_region
        %s374 = ssub.s32 %s16, 2
        // Predicated region
        $region49: #{tpu_custom_call.1} parent=47 // pred_check
          %p375 = pneg %p176
        $region50: #{tpu_custom_call.1} parent=47 // pred_check_branch
          %377 = sbr.rel (%p375) target = $region52
        $region51: #{tpu_custom_call.1} parent=47 // pred_region
          %s378 = sand.u32 %s161, 1
          %s379 = scalar_lea.sflag [#allocation4], %s378
          %s380 = sand.u32 %s161, 1
          %s381 = smul.addr %s380, 8
          %s382 = scalar_lea.vmem [#allocation5], %s381
          %384 = dma.done %s379, 128
        $region52: #{tpu_custom_call.1} parent=47 // pred_fallthru
          _
      $region48: #{tpu_custom_call.1} parent=5 // pred_fallthru
        _
    $region6: #{tpu_custom_call.1} parent=1 // loop_footer
      %s20 = sadd.s32 1, %s16
    $region7: #{tpu_custom_call.1} parent=1 // loop_footer_branch
      %15 = sbr.rel target = $region3
    $region8: #{tpu_custom_call.1} parent=1 // loop_exit
      _
    %385 = vsyncpa [#allocation3], 1
    %s386 = scalar_lea.sflag [#allocation3], 1
    %387 = vsyncpa %s386, 1
    %388 = vsyncpa [#allocation4], 1
    %s389 = scalar_lea.sflag [#allocation4], 1
    %390 = vsyncpa %s389, 1

</llo_original>
